<compile_context>
chip_gen: v7x
topology: tpu7x:2x2x1
jax: 0.10.0
libtpu: 0.0.40
codegen_flags: <defaults>
</compile_context>

<pallas_src>
import functools

import jax
import jax.numpy as jnp
from jax.experimental import pallas as pl
from jax.experimental.pallas import tpu as pltpu


# ---------------------------------------------------------------------------
# Kernel helpers
# ---------------------------------------------------------------------------

def _refined_reciprocal(s):
    """EUP approximate reciprocal + one Newton-Raphson step (~f32 accurate)."""
    r = pl.reciprocal(s, approx=True)
    return r * (2.0 - s * r)


def _group_sum(v_f32, gm_bf16):
    """Per-group row sum via the MXU: v @ gmat, broadcast back to every lane.

    v is f32; split into hi + lo bf16 parts so each dot is a native
    single-pass bf16 matmul (the 0/1 indicator RHS is exact in bf16).  Two
    passes give ~f32 accuracy at a third of Precision.HIGHEST's MXU work,
    keeping the reduction strictly cheaper than HBM streaming on v5e/v6e/v7x.
    """
    hi = v_f32.astype(jnp.bfloat16)
    lo = (v_f32 - hi.astype(jnp.float32)).astype(jnp.bfloat16)
    return (jnp.dot(hi, gm_bf16, preferred_element_type=jnp.float32)
            + jnp.dot(lo, gm_bf16, preferred_element_type=jnp.float32))


# ---------------------------------------------------------------------------
# Kernels
# ---------------------------------------------------------------------------

def _ln_rows_kernel(x_ref, a_ref, b_ref, o_ref, *, eps, feat):
    """LayerNorm over the full last axis of the block.  Block: (row_tile, D)."""
    x = x_ref[...].astype(jnp.float32)
    mean = jnp.mean(x, axis=-1, keepdims=True)
    c = x - mean
    # PyTorch tensor.std() is unbiased (divides by D-1).
    var = jnp.sum(c * c, axis=-1, keepdims=True) * (1.0 / (feat - 1))
    inv = _refined_reciprocal(jnp.sqrt(var) + eps)
    o_ref[...] = (a_ref[...] * c * inv + b_ref[...]).astype(o_ref.dtype)


def _ln_packed_kernel(x_ref, g_ref, a_ref, b_ref, o_ref, *, eps, feat):
    """LayerNorm with G = W // feat logical rows packed per 128-lane row.

    g_ref is a (W, W) 0/1 same-group indicator (bf16, exact).  x @ g gives
    every lane the sum over its own group (segmented reduction on the
    otherwise-idle MXU), already broadcast back to all lanes of that group,
    so no cross-lane VPU/XLU reduction or in-kernel relayout is needed.
    """
    x = x_ref[...].astype(jnp.float32)               # (row_tile, W)
    gm = g_ref[...]                                  # (W, W) bf16 0/1
    mean = _group_sum(x, gm) * (1.0 / feat)
    c = x - mean
    var = _group_sum(c * c, gm) * (1.0 / (feat - 1))  # unbiased (D-1)
    inv = _refined_reciprocal(jnp.sqrt(var) + eps)
    o_ref[...] = (a_ref[...] * c * inv + b_ref[...]).astype(o_ref.dtype)


# ---------------------------------------------------------------------------
# Wrapper
# ---------------------------------------------------------------------------

def _round_up(n, m):
    return ((n + m - 1) // m) * m


def _cdiv(a, b):
    return -(-a // b)


def _pick_row_tile(n_rows, width, itemsize, target_bytes=2 << 20, cap=16384,
                   min_steps=2):
    """Largest row tile s.t. one (row_tile, width) block is ~target_bytes.

    2 bufs x (in + out) x ~2 MiB ~= 8 MiB stays inside every generation's
    scoped-VMEM default (v5e 16 MiB, v6e/v7x 32 MiB; v7x physical 64 MiB).
    If the whole problem would otherwise fit in one block, split into at
    least `min_steps` blocks so dimension_semantics=("parallel",) can shard
    the grid over v7x's two TensorCores.
    """
    t = max(8, int(target_bytes) // max(1, width * itemsize))
    t = min(int(t), cap)
    t -= t % 8
    t = max(t, 8)
    if n_rows >= 2 * 8 and _cdiv(n_rows, t) < min_steps:
        t = max(8, _round_up(_cdiv(n_rows, min_steps), 8))
    return min(t, _round_up(int(n_rows), 8))


def layernorm_pallas(x2d, a_2, b_2, eps=1e-6):
    """x2d: (R, D).  LayerNorm over D with PyTorch (unbiased-std) semantics."""
    R, D = x2d.shape
    out_dtype = x2d.dtype
    itemsize = jnp.dtype(out_dtype).itemsize

    # Pack G logical rows per 128-lane vreg row when D is a small divisor of
    # 128, so HBM<->VMEM DMAs and vector stores are lane-dense (unmasked vst).
    G = 128 // D if (1 < D < 128 and 128 % D == 0) else 1

    a_f = a_2.astype(jnp.float32).reshape(1, D)
    b_f = b_2.astype(jnp.float32).reshape(1, D)

    if G > 1:
        W = G * D
        # Zero-pad rows to a multiple of 8*G: the packed row count stays a
        # multiple of the 8-sublane tile and we never fall back to the
        # lane-sparse (masked-store) path.  Pads at most 8*G - 1 rows.
        R_pad = _round_up(R, 8 * G)
        xp = x2d if R_pad == R else jnp.pad(x2d, ((0, R_pad - R), (0, 0)))
        Rp = R_pad // G
        xw = xp.reshape(Rp, W)                 # free: identical row-major bytes
        a_w = jnp.tile(a_f, (1, G))            # lane j -> a_2[j % D]
        b_w = jnp.tile(b_f, (1, G))
        lane_group = jnp.arange(W, dtype=jnp.int32) // D
        gmat = (lane_group[:, None] == lane_group[None, :]).astype(jnp.bfloat16)
    else:
        W = D
        R_pad = _round_up(R, 8)
        xp = x2d if R_pad == R else jnp.pad(x2d, ((0, R_pad - R), (0, 0)))
        Rp, xw, a_w, b_w, gmat = R_pad, xp, a_f, b_f, None

    row_tile = _pick_row_tile(Rp, W, itemsize)
    grid = (_cdiv(Rp, row_tile),)

    x_spec = pl.BlockSpec((row_tile, W), lambda i: (i, 0))
    p_spec = pl.BlockSpec((1, W), lambda i: (0, 0))
    o_spec = pl.BlockSpec((row_tile, W), lambda i: (i, 0))

    flops = 8 * Rp * W + (8 * Rp * W * W if G > 1 else 0)
    transc = 2 * Rp * (W if G > 1 else 1)
    cost = pl.CostEstimate(
        flops=int(flops),
        transcendentals=int(transc),
        bytes_accessed=int(2 * Rp * W * itemsize + 2 * W * 4
                           + (W * W * 2 if G > 1 else 0)),
    )
    cparams = pltpu.CompilerParams(
        dimension_semantics=("parallel",),
        vmem_limit_bytes=32 * 1024 * 1024,
    )

    if G > 1:
        kernel = functools.partial(_ln_packed_kernel, eps=eps, feat=D)
        y = pl.pallas_call(
            kernel,
            out_shape=jax.ShapeDtypeStruct((Rp, W), out_dtype),
            grid_spec=pltpu.PrefetchScalarGridSpec(
                num_scalar_prefetch=0,
                grid=grid,
                in_specs=[x_spec,
                          pl.BlockSpec((W, W), lambda i: (0, 0)),
                          p_spec, p_spec],
                out_specs=o_spec,
            ),
            compiler_params=cparams,
            cost_estimate=cost,
        )(xw, gmat, a_w, b_w)
        y = y.reshape(R_pad, D)
        return y[:R] if R_pad != R else y

    kernel = functools.partial(_ln_rows_kernel, eps=eps, feat=D)
    y = pl.pallas_call(
        kernel,
        out_shape=jax.ShapeDtypeStruct((Rp, W), out_dtype),
        grid_spec=pltpu.PrefetchScalarGridSpec(
            num_scalar_prefetch=0,
            grid=grid,
            in_specs=[x_spec, p_spec, p_spec],
            out_specs=o_spec,
        ),
        compiler_params=cparams,
        cost_estimate=cost,
    )(xw, a_w, b_w)
    return y[:R] if R_pad != R else y


def encoder_forward(x, a_2, b_2, n_layers=2, eps=1e-6):
    """Encoder.forward: apply N injected sub-layers, then the final LayerNorm.

    x: (B, S, D).
    """
    # TODO(synk): `layer(x)` is an injected module with no definition in the
    # reference file; it is applied as identity here (the Pallas kernel owns
    # only the final LayerNorm).  Once the layer exists, fuse this norm into
    # that kernel's output-tile epilogue to save one full R*D HBM round trip
    # (the largest remaining structural win for this HBM-bound op).
    for _ in range(n_layers):
        x = x

    B, S, D = x.shape
    y = layernorm_pallas(x.reshape(B * S, D), a_2, b_2, eps=eps)
    return y.reshape(B, S, D)


# ---------------------------------------------------------------------------
# Reference + self-test
# ---------------------------------------------------------------------------

def _reference_layernorm(x, a_2, b_2, eps=1e-6):
    x = x.astype(jnp.float32)
    mean = jnp.mean(x, axis=-1, keepdims=True)
    c = x - mean
    std = jnp.sqrt(jnp.sum(c * c, axis=-1, keepdims=True) / (x.shape[-1] - 1))
    return a_2 * c / (std + eps) + b_2


if __name__ == "__main__":
    key = jax.random.PRNGKey(0)
    k_x, k_a, k_b, k_x2, k_a2, k_b2 = jax.random.split(key, 6)

    # --- main config: batch=2, seq=8, d_model=32 (packed / lane-dense path);
    #     random affine params so the lane -> param[j % D] mapping is tested.
    B, S, D = 2, 8, 32
    N_LAYERS = 2
    x = jax.random.normal(k_x, (B, S, D), dtype=jnp.float32)
    a_2 = 1.0 + 0.1 * jax.random.normal(k_a, (D,), dtype=jnp.float32)
    b_2 = 0.1 * jax.random.normal(k_b, (D,), dtype=jnp.float32)

    out = jax.block_until_ready(encoder_forward(x, a_2, b_2, n_layers=N_LAYERS))
    ref = _reference_layernorm(x, a_2, b_2)
    assert out.shape == (B, S, D)
    assert jnp.max(jnp.abs(out - ref)) < 1e-3, "mismatch vs reference (packed path)"

    # --- secondary config: D=128 exercises the generic (row-reduce) path and
    #     a multi-step grid (megacore sharding). ---
    D2 = 128
    x2 = jax.random.normal(k_x2, (B, S, D2), dtype=jnp.float32)
    a2 = 1.0 + 0.1 * jax.random.normal(k_a2, (D2,), dtype=jnp.float32)
    b2 = 0.1 * jax.random.normal(k_b2, (D2,), dtype=jnp.float32)
    out2 = jax.block_until_ready(encoder_forward(x2, a2, b2, n_layers=N_LAYERS))
    ref2 = _reference_layernorm(x2, a2, b2)
    assert jnp.max(jnp.abs(out2 - ref2)) < 1e-3, "mismatch vs reference (generic path)"

    # --- bf16 I/O, row count not a multiple of 8*G: exercises padding path ---
    xb = jax.random.normal(k_x, (3, 8, D), dtype=jnp.float32).astype(jnp.bfloat16)
    out3 = jax.block_until_ready(encoder_forward(xb, a_2, b_2, n_layers=N_LAYERS))
    ref3 = _reference_layernorm(xb.astype(jnp.float32), a_2, b_2)
    assert out3.shape == (3, 8, D)
    assert jnp.max(jnp.abs(out3.astype(jnp.float32) - ref3)) < 3e-2, "mismatch (bf16)"

    print("KERNEL_OK")
</pallas_src>

<mosaic_0001>
module attributes {stable_mosaic.version = 11 : i64} {
  func.func @_ln_packed_kernel(%arg0: i32, %arg1: memref<8x128xf32, #tpu.memory_space<vmem>>, %arg2: memref<128x128xbf16, #tpu.memory_space<vmem>>, %arg3: memref<1x128xf32, #tpu.memory_space<vmem>>, %arg4: memref<1x128xf32, #tpu.memory_space<vmem>>, %arg5: memref<8x128xf32, #tpu.memory_space<vmem>>) attributes {dimension_semantics = [#tpu.dimension_semantics<parallel>], iteration_bounds = array<i64: 1>, scalar_prefetch = 0 : i64, scratch_operands = 0 : i64, tpu.core_type = #tpu.core_type<tc>, window_params = [{transform_indices = @transform_0, window_bounds = array<i64: 8, 128>}, {pipeline_mode = #tpu.pipeline_mode<synchronous>, transform_indices = @transform_1, window_bounds = array<i64: 128, 128>}, {pipeline_mode = #tpu.pipeline_mode<synchronous>, transform_indices = @transform_2, window_bounds = array<i64: 1, 128>}, {pipeline_mode = #tpu.pipeline_mode<synchronous>, transform_indices = @transform_3, window_bounds = array<i64: 1, 128>}, {transform_indices = @transform_4, window_bounds = array<i64: 8, 128>}]} {
    %c0 = arith.constant 0 : index
    %c0_0 = arith.constant 0 : index
    %0 = vector.load %arg1[%c0, %c0_0] : memref<8x128xf32, #tpu.memory_space<vmem>>, vector<8x128xf32>
    %c0_1 = arith.constant 0 : index
    %c0_2 = arith.constant 0 : index
    %1 = vector.load %arg2[%c0_1, %c0_2] : memref<128x128xbf16, #tpu.memory_space<vmem>>, vector<128x128xbf16>
    %2 = arith.truncf %0 : vector<8x128xf32> to vector<8x128xbf16>
    %3 = arith.extf %2 : vector<8x128xbf16> to vector<8x128xf32>
    %4 = arith.subf %0, %3 : vector<8x128xf32>
    %5 = arith.truncf %4 : vector<8x128xf32> to vector<8x128xbf16>
    %cst = arith.constant dense<0.000000e+00> : vector<8x128xf32>
    %6 = tpu.matmul %2, %1, %cst {dimension_numbers = #tpu.dot_dimension_numbers<[1], [0], [0], [1], [0, 0, 1, 1], [], []>} : vector<8x128xbf16>, vector<128x128xbf16>, vector<8x128xf32> -> vector<8x128xf32>
    %cst_3 = arith.constant dense<0.000000e+00> : vector<8x128xf32>
    %7 = tpu.matmul %5, %1, %cst_3 {dimension_numbers = #tpu.dot_dimension_numbers<[1], [0], [0], [1], [0, 0, 1, 1], [], []>} : vector<8x128xbf16>, vector<128x128xbf16>, vector<8x128xf32> -> vector<8x128xf32>
    %8 = arith.addf %6, %7 : vector<8x128xf32>
    %cst_4 = arith.constant 3.125000e-02 : f32
    %9 = vector.broadcast %cst_4 : f32 to vector<8x128xf32>
    %10 = arith.mulf %8, %9 : vector<8x128xf32>
    %11 = arith.subf %0, %10 : vector<8x128xf32>
    %12 = arith.mulf %11, %11 : vector<8x128xf32>
    %13 = arith.truncf %12 : vector<8x128xf32> to vector<8x128xbf16>
    %14 = arith.extf %13 : vector<8x128xbf16> to vector<8x128xf32>
    %15 = arith.subf %12, %14 : vector<8x128xf32>
    %16 = arith.truncf %15 : vector<8x128xf32> to vector<8x128xbf16>
    %cst_5 = arith.constant dense<0.000000e+00> : vector<8x128xf32>
    %17 = tpu.matmul %13, %1, %cst_5 {dimension_numbers = #tpu.dot_dimension_numbers<[1], [0], [0], [1], [0, 0, 1, 1], [], []>} : vector<8x128xbf16>, vector<128x128xbf16>, vector<8x128xf32> -> vector<8x128xf32>
    %cst_6 = arith.constant dense<0.000000e+00> : vector<8x128xf32>
    %18 = tpu.matmul %16, %1, %cst_6 {dimension_numbers = #tpu.dot_dimension_numbers<[1], [0], [0], [1], [0, 0, 1, 1], [], []>} : vector<8x128xbf16>, vector<128x128xbf16>, vector<8x128xf32> -> vector<8x128xf32>
    %19 = arith.addf %17, %18 : vector<8x128xf32>
    %cst_7 = arith.constant 0.0322580636 : f32
    %20 = vector.broadcast %cst_7 : f32 to vector<8x128xf32>
    %21 = arith.mulf %19, %20 : vector<8x128xf32>
    %22 = math.sqrt %21 : vector<8x128xf32>
    %cst_8 = arith.constant 9.99999997E-7 : f32
    %23 = vector.broadcast %cst_8 : f32 to vector<8x128xf32>
    %24 = arith.addf %22, %23 : vector<8x128xf32>
    %25 = tpu.reciprocal %24 {approx = true} : vector<8x128xf32> -> vector<8x128xf32>
    %26 = arith.mulf %24, %25 : vector<8x128xf32>
    %cst_9 = arith.constant 2.000000e+00 : f32
    %27 = vector.broadcast %cst_9 : f32 to vector<8x128xf32>
    %28 = arith.subf %27, %26 : vector<8x128xf32>
    %29 = arith.mulf %25, %28 : vector<8x128xf32>
    %c0_10 = arith.constant 0 : index
    %c0_11 = arith.constant 0 : index
    %30 = vector.load %arg3[%c0_10, %c0_11] : memref<1x128xf32, #tpu.memory_space<vmem>>, vector<1x128xf32>
    %31 = vector.broadcast %30 : vector<1x128xf32> to vector<8x128xf32>
    %32 = arith.mulf %31, %11 : vector<8x128xf32>
    %33 = arith.mulf %32, %29 : vector<8x128xf32>
    %c0_12 = arith.constant 0 : index
    %c0_13 = arith.constant 0 : index
    %34 = vector.load %arg4[%c0_12, %c0_13] : memref<1x128xf32, #tpu.memory_space<vmem>>, vector<1x128xf32>
    %35 = vector.broadcast %34 : vector<1x128xf32> to vector<8x128xf32>
    %36 = arith.addf %33, %35 : vector<8x128xf32>
    %c0_14 = arith.constant 0 : index
    %c0_15 = arith.constant 0 : index
    %37 = vector.load %arg5[%c0_14, %c0_15] : memref<8x128xf32, #tpu.memory_space<vmem>>, vector<8x128xf32>
    tpu.vector_store %arg5[%c0_14, %c0_15], %36 {strides = array<i32>} : memref<8x128xf32, #tpu.memory_space<vmem>>, vector<8x128xf32>,
    return
  }
  func.func @transform_0(%arg0: i32) -> (i32, i32) {
    %c0_i32 = arith.constant 0 : i32
    %c0_i32_0 = arith.constant 0 : i32
    return %arg0, %c0_i32 : i32, i32
  }
  func.func @transform_1(%arg0: i32) -> (i32, i32) {
    %c0_i32 = arith.constant 0 : i32
    %c0_i32_0 = arith.constant 0 : i32
    %c0_i32_1 = arith.constant 0 : i32
    return %c0_i32, %c0_i32_0 : i32, i32
  }
  func.func @transform_2(%arg0: i32) -> (i32, i32) {
    %c0_i32 = arith.constant 0 : i32
    %c0_i32_0 = arith.constant 0 : i32
    %c0_i32_1 = arith.constant 0 : i32
    return %c0_i32, %c0_i32_0 : i32, i32
  }
  func.func @transform_3(%arg0: i32) -> (i32, i32) {
    %c0_i32 = arith.constant 0 : i32
    %c0_i32_0 = arith.constant 0 : i32
    %c0_i32_1 = arith.constant 0 : i32
    return %c0_i32, %c0_i32_0 : i32, i32
  }
  func.func @transform_4(%arg0: i32) -> (i32, i32) {
    %c0_i32 = arith.constant 0 : i32
    %c0_i32_0 = arith.constant 0 : i32
    return %arg0, %c0_i32 : i32, i32
  }
}

</mosaic_0001>

<llo_original>
// kernel: tpu_custom_call.1
$region0: #{tpu_custom_call.1}
  #allocation0 [shape = 'u32[]', space=smem, size = 0x4, offset = 0x4, fixed_abs, tag = 'smem constant byte address 0x4 - core index']
  #allocation1 [shape = 'u32[144,128]{1,0:T(1,128)}', space=vmem, size = 0x12000, scoped, tag = 'internal scratch']
  %s0 = inlined_call_operand.hbm [shape: f32[8,128], index: 0, kind: input, shape index: {}]
  %s1 = inlined_call_operand.hbm [shape: bf16[128,128], index: 1, kind: input, shape index: {}]
  %s2 = inlined_call_operand.vmem [shape: f32[1,128], index: 2, kind: input, shape index: {}]
  %s3 = inlined_call_operand.vmem [shape: f32[1,128], index: 3, kind: input, shape index: {}]
  %s4 = inlined_call_operand.hbm [shape: f32[8,128], index: 4, kind: output, shape index: {}]
  %s5 = sld [smem:[#allocation0]]
  $region34: #{tpu_custom_call.1} parent=0
    _
  %s7 = ssub.s32 1, %s5
  %s8 = scalar_select 0, %s7, %s5
  $region1: #{tpu_custom_call.1} parent=0
    #allocation2 [shape = 'u8[4096]{0}', space=vmem, size = 0x1000, scoped, tag = 'input window, operand 0, single buffered']
    #allocation3 [shape = 's32[1]{0}', space=sflag, size = 0x4, scoped, tag = 'scoped memory for tpu_custom_call.1']
    #allocation4 [shape = 's32[1]{0}', space=sflag, size = 0x4, scoped, tag = 'scoped memory for tpu_custom_call.1']
    #allocation5 [shape = 'u8[32768]{0}', space=vmem, size = 0x8000, scoped, tag = 'input window, operand 1, single buffered']
    #allocation6 [shape = 's32[1]{0}', space=sflag, size = 0x4, scoped, tag = 'scoped memory for tpu_custom_call.1']
    #allocation7 [shape = 'u8[4096]{0}', space=vmem, size = 0x1000, scoped, tag = 'output window, operand 0, single buffered']
    %9 = vsyncpa [#allocation3], 0
    %10 = vsyncpa [#allocation6], 0
    %11 = vsyncpa [#allocation4], 0
    // Predicated region
    $region2: #{tpu_custom_call.1} parent=1 // pred_check
      _
    $region3: #{tpu_custom_call.1} parent=1 // pred_check_branch
      %13 = sbr.rel (0) target = $region5
    $region4: #{tpu_custom_call.1} parent=1 // pred_region
      %s15 = ssub.s32 128, 128
      %16 = vsyncadd [#allocation3], %s15
      %s18 = sshll.u32 [#allocation2], 4
      %s19 = int_to_ptr.vmem [resolvable:$true] %s18
      %21 = dma.hbm_to_vmem [thread:$0]  %s0, 128, %s19, [#allocation3]
    $region5: #{tpu_custom_call.1} parent=1 // pred_fallthru
      _
    // Predicated region
    $region6: #{tpu_custom_call.1} parent=1 // pred_check
      _
    $region7: #{tpu_custom_call.1} parent=1 // pred_check_branch
      %23 = sbr.rel (0) target = $region9
    $region8: #{tpu_custom_call.1} parent=1 // pred_region
      %s25 = ssub.s32 1024, 1024
      %26 = vsyncadd [#allocation6], %s25
      %s27 = sshll.u32 [#allocation5], 4
      %s28 = int_to_ptr.vmem [resolvable:$true] %s27
      %33 = dma.hbm_to_vmem [thread:$0]  %s1, 1024, %s28, [#allocation6], 64, 64, 4
    $region9: #{tpu_custom_call.1} parent=1 // pred_fallthru
      _
    // Predicated region
    $region10: #{tpu_custom_call.1} parent=1 // pred_check
      _
    $region11: #{tpu_custom_call.1} parent=1 // pred_check_branch
      %35 = sbr.rel (0) target = $region13
    $region12: #{tpu_custom_call.1} parent=1 // pred_region
      _
    $region13: #{tpu_custom_call.1} parent=1 // pred_fallthru
      _
    // Predicated region
    $region14: #{tpu_custom_call.1} parent=1 // pred_check
      _
    $region15: #{tpu_custom_call.1} parent=1 // pred_check_branch
      %37 = sbr.rel (0) target = $region17
    $region16: #{tpu_custom_call.1} parent=1 // pred_region
      _
    $region17: #{tpu_custom_call.1} parent=1 // pred_fallthru
      _
    // Predicated region
    $region18: #{tpu_custom_call.1} parent=1 // pred_check
      _
    $region19: #{tpu_custom_call.1} parent=1 // pred_check_branch
      %39 = sbr.rel (0) target = $region21
    $region20: #{tpu_custom_call.1} parent=1 // pred_region
      %40 = dma.done [#allocation3], 128
    $region21: #{tpu_custom_call.1} parent=1 // pred_fallthru
      _
    // Predicated region
    $region22: #{tpu_custom_call.1} parent=1 // pred_check
      _
    $region23: #{tpu_custom_call.1} parent=1 // pred_check_branch
      %42 = sbr.rel (0) target = $region25
    $region24: #{tpu_custom_call.1} parent=1 // pred_region
      %43 = dma.done [#allocation6], 1024
    $region25: #{tpu_custom_call.1} parent=1 // pred_fallthru
      _
    %v45 = vld [vmem:[#allocation2] sm:$0xff]
    %v46 = vld [vmem:[#allocation5] sm:$0xf]
    %v47 = vld [vmem:[#allocation5 + $0x4] sm:$0xf]
    %v48 = vld [vmem:[#allocation5 + $0x8] sm:$0xf]
    %v49 = vld [vmem:[#allocation5 + $0xc] sm:$0xf]
    %v50 = vld [vmem:[#allocation5 + $0x10] sm:$0xf]
    %v51 = vld [vmem:[#allocation5 + $0x14] sm:$0xf]
    %v52 = vld [vmem:[#allocation5 + $0x18] sm:$0xf]
    %v53 = vld [vmem:[#allocation5 + $0x1c] sm:$0xf]
    %v54 = vld [vmem:[#allocation5 + $0x20] sm:$0xf]
    %v55 = vld [vmem:[#allocation5 + $0x24] sm:$0xf]
    %v56 = vld [vmem:[#allocation5 + $0x28] sm:$0xf]
    %v57 = vld [vmem:[#allocation5 + $0x2c] sm:$0xf]
    %v58 = vld [vmem:[#allocation5 + $0x30] sm:$0xf]
    %v59 = vld [vmem:[#allocation5 + $0x34] sm:$0xf]
    %v60 = vld [vmem:[#allocation5 + $0x38] sm:$0xf]
    %v61 = vld [vmem:[#allocation5 + $0x3c] sm:$0xf]
    %v62 = vpack.c.bf16 %v45, %v45
    %v63 = vunpack.c.l.bf16 %v62
    %v64 = vsub.f32 %v45, %v63
    %v65 = vpack.c.bf16 %v64, %v64
    %v82 = vunpack.c.l.b16 %v46
    %v83 = vunpack.c.l.b16 %v47
    %v84 = vunpack.c.l.b16 %v48
    %v85 = vunpack.c.l.b16 %v49
    %v86 = vunpack.c.l.b16 %v50
    %v87 = vunpack.c.l.b16 %v51
    %v88 = vunpack.c.l.b16 %v52
    %v89 = vunpack.c.l.b16 %v53
    %v90 = vunpack.c.l.b16 %v54
    %v91 = vunpack.c.l.b16 %v55
    %v92 = vunpack.c.l.b16 %v56
    %v93 = vunpack.c.l.b16 %v57
    %v94 = vunpack.c.l.b16 %v58
    %v95 = vunpack.c.l.b16 %v59
    %v96 = vunpack.c.l.b16 %v60
    %v97 = vunpack.c.l.b16 %v61
    %v98 = vpack.c.b16 %v83, %v82
    %v99 = vpack.c.b16 %v85, %v84
    %v100 = vpack.c.b16 %v87, %v86
    %v101 = vpack.c.b16 %v89, %v88
    %v102 = vpack.c.b16 %v91, %v90
    %v103 = vpack.c.b16 %v93, %v92
    %v104 = vpack.c.b16 %v95, %v94
    %v105 = vpack.c.b16 %v97, %v96
    %114 = vmatprep.subr.bf16.mxu0 0
    %115 = vmatpush1.bf16.msra.mxu0 %v98
    %116 = vmatprep.subr.bf16.mxu0 0
    %117 = vmatpush1.bf16.msra.mxu0 %v99
    %118 = vmatprep.subr.bf16.mxu0 0
    %119 = vmatpush1.bf16.msra.mxu0 %v100
    %120 = vmatprep.subr.bf16.mxu0 0
    %121 = vmatpush1.bf16.msra.mxu0 %v101
    %122 = vmatprep.subr.bf16.mxu0 0
    %123 = vmatpush1.bf16.msra.mxu0 %v102
    %124 = vmatprep.subr.bf16.mxu0 0
    %125 = vmatpush1.bf16.msra.mxu0 %v103
    %126 = vmatprep.subr.bf16.mxu0 0
    %127 = vmatpush1.bf16.msra.mxu0 %v104
    %128 = vmatprep.subr.bf16.mxu0 0
    %129 = vmatpush1.bf16.msra.mxu0 %v105
    %130 = vmatprep.subr.bf16.mxu0 0
    %131 = vmatpush1.bf16.msra.mxu0 0
    %132 = vmatprep.subr.bf16.mxu0 0
    %133 = vmatpush1.bf16.msra.mxu0 0
    %134 = vmatprep.subr.bf16.mxu0 0
    %135 = vmatpush1.bf16.msra.mxu0 0
    %136 = vmatprep.subr.bf16.mxu0 0
    %137 = vmatpush1.bf16.msra.mxu0 0
    %138 = vmatprep.subr.bf16.mxu0 0
    %139 = vmatpush1.bf16.msra.mxu0 0
    %140 = vmatprep.subr.bf16.mxu0 0
    %141 = vmatpush1.bf16.msra.mxu0 0
    %142 = vmatprep.subr.bf16.mxu0 0
    %143 = vmatpush1.bf16.msra.mxu0 0
    %144 = vmatprep.subr.bf16.mxu0 0
    %145 = vmatpush1.bf16.msra.mxu0 0
    %146 = vmatprep.mubr.bf16.mxu0 0
    %147 = vmatmul.mubr.bf16.gmra.mrb[0].mxu0 %v65
    %v148 = vpop.f32.mrb[0].mxu0
    %v149 = vadd.f32 0.0, %v148
    %v150 = vpop.f32.mrb[0].mxu0
    %v151 = vpop.f32.mrb[0].mxu0
    %v152 = vpop.f32.mrb[0].mxu0
    %153 = vdwg.mxu0
    %154 = vmatprep.subr.bf16.mxu0 0
    %155 = vmatpush1.bf16.msra.mxu0 %v98
    %156 = vmatprep.subr.bf16.mxu0 0
    %157 = vmatpush1.bf16.msra.mxu0 %v99
    %158 = vmatprep.subr.bf16.mxu0 0
    %159 = vmatpush1.bf16.msra.mxu0 %v100
    %160 = vmatprep.subr.bf16.mxu0 0
    %161 = vmatpush1.bf16.msra.mxu0 %v101
    %162 = vmatprep.subr.bf16.mxu0 0
    %163 = vmatpush1.bf16.msra.mxu0 %v102
    %164 = vmatprep.subr.bf16.mxu0 0
    %165 = vmatpush1.bf16.msra.mxu0 %v103
    %166 = vmatprep.subr.bf16.mxu0 0
    %167 = vmatpush1.bf16.msra.mxu0 %v104
    %168 = vmatprep.subr.bf16.mxu0 0
    %169 = vmatpush1.bf16.msra.mxu0 %v105
    %170 = vmatprep.subr.bf16.mxu0 0
    %171 = vmatpush1.bf16.msra.mxu0 0
    %172 = vmatprep.subr.bf16.mxu0 0
    %173 = vmatpush1.bf16.msra.mxu0 0
    %174 = vmatprep.subr.bf16.mxu0 0
    %175 = vmatpush1.bf16.msra.mxu0 0
    %176 = vmatprep.subr.bf16.mxu0 0
    %177 = vmatpush1.bf16.msra.mxu0 0
    %178 = vmatprep.subr.bf16.mxu0 0
    %179 = vmatpush1.bf16.msra.mxu0 0
    %180 = vmatprep.subr.bf16.mxu0 0
    %181 = vmatpush1.bf16.msra.mxu0 0
    %182 = vmatprep.subr.bf16.mxu0 0
    %183 = vmatpush1.bf16.msra.mxu0 0
    %184 = vmatprep.subr.bf16.mxu0 0
    %185 = vmatpush1.bf16.msra.mxu0 0
    %186 = vmatprep.mubr.bf16.mxu0 0
    %187 = vmatmul.mubr.bf16.gmra.mrb[0].mxu0 %v62
    %v188 = vpop.f32.mrb[0].mxu0
    %v189 = vadd.f32 %v149, %v188
    %v190 = vpop.f32.mrb[0].mxu0
    %v191 = vpop.f32.mrb[0].mxu0
    %v192 = vpop.f32.mrb[0].mxu0
    %193 = vdwg.mxu0
    %v194 = vmul.f32 %v189, 0.03125
    %v195 = vsub.f32 %v45, %v194
    %v196 = vmul.f32 %v195, %v195
    %v197 = vpack.c.bf16 %v196, %v196
    %v198 = vunpack.c.l.bf16 %v197
    %v199 = vsub.f32 %v196, %v198
    %v200 = vpack.c.bf16 %v199, %v199
    %201 = vmatprep.subr.bf16.mxu0 0
    %202 = vmatpush1.bf16.msra.mxu0 %v98
    %203 = vmatprep.subr.bf16.mxu0 0
    %204 = vmatpush1.bf16.msra.mxu0 %v99
    %205 = vmatprep.subr.bf16.mxu0 0
    %206 = vmatpush1.bf16.msra.mxu0 %v100
    %207 = vmatprep.subr.bf16.mxu0 0
    %208 = vmatpush1.bf16.msra.mxu0 %v101
    %209 = vmatprep.subr.bf16.mxu0 0
    %210 = vmatpush1.bf16.msra.mxu0 %v102
    %211 = vmatprep.subr.bf16.mxu0 0
    %212 = vmatpush1.bf16.msra.mxu0 %v103
    %213 = vmatprep.subr.bf16.mxu0 0
    %214 = vmatpush1.bf16.msra.mxu0 %v104
    %215 = vmatprep.subr.bf16.mxu0 0
    %216 = vmatpush1.bf16.msra.mxu0 %v105
    %217 = vmatprep.subr.bf16.mxu0 0
    %218 = vmatpush1.bf16.msra.mxu0 0
    %219 = vmatprep.subr.bf16.mxu0 0
    %220 = vmatpush1.bf16.msra.mxu0 0
    %221 = vmatprep.subr.bf16.mxu0 0
    %222 = vmatpush1.bf16.msra.mxu0 0
    %223 = vmatprep.subr.bf16.mxu0 0
    %224 = vmatpush1.bf16.msra.mxu0 0
    %225 = vmatprep.subr.bf16.mxu0 0
    %226 = vmatpush1.bf16.msra.mxu0 0
    %227 = vmatprep.subr.bf16.mxu0 0
    %228 = vmatpush1.bf16.msra.mxu0 0
    %229 = vmatprep.subr.bf16.mxu0 0
    %230 = vmatpush1.bf16.msra.mxu0 0
    %231 = vmatprep.subr.bf16.mxu0 0
    %232 = vmatpush1.bf16.msra.mxu0 0
    %233 = vmatprep.mubr.bf16.mxu0 0
    %234 = vmatmul.mubr.bf16.gmra.mrb[0].mxu0 %v200
    %v235 = vpop.f32.mrb[0].mxu0
    %v236 = vadd.f32 0.0, %v235
    %v237 = vpop.f32.mrb[0].mxu0
    %v238 = vpop.f32.mrb[0].mxu0
    %v239 = vpop.f32.mrb[0].mxu0
    %240 = vdwg.mxu0
    %241 = vmatprep.subr.bf16.mxu0 0
    %242 = vmatpush1.bf16.msra.mxu0 %v98
    %243 = vmatprep.subr.bf16.mxu0 0
    %244 = vmatpush1.bf16.msra.mxu0 %v99
    %245 = vmatprep.subr.bf16.mxu0 0
    %246 = vmatpush1.bf16.msra.mxu0 %v100
    %247 = vmatprep.subr.bf16.mxu0 0
    %248 = vmatpush1.bf16.msra.mxu0 %v101
    %249 = vmatprep.subr.bf16.mxu0 0
    %250 = vmatpush1.bf16.msra.mxu0 %v102
    %251 = vmatprep.subr.bf16.mxu0 0
    %252 = vmatpush1.bf16.msra.mxu0 %v103
    %253 = vmatprep.subr.bf16.mxu0 0
    %254 = vmatpush1.bf16.msra.mxu0 %v104
    %255 = vmatprep.subr.bf16.mxu0 0
    %256 = vmatpush1.bf16.msra.mxu0 %v105
    %257 = vmatprep.subr.bf16.mxu0 0
    %258 = vmatpush1.bf16.msra.mxu0 0
    %259 = vmatprep.subr.bf16.mxu0 0
    %260 = vmatpush1.bf16.msra.mxu0 0
    %261 = vmatprep.subr.bf16.mxu0 0
    %262 = vmatpush1.bf16.msra.mxu0 0
    %263 = vmatprep.subr.bf16.mxu0 0
    %264 = vmatpush1.bf16.msra.mxu0 0
    %265 = vmatprep.subr.bf16.mxu0 0
    %266 = vmatpush1.bf16.msra.mxu0 0
    %267 = vmatprep.subr.bf16.mxu0 0
    %268 = vmatpush1.bf16.msra.mxu0 0
    %269 = vmatprep.subr.bf16.mxu0 0
    %270 = vmatpush1.bf16.msra.mxu0 0
    %271 = vmatprep.subr.bf16.mxu0 0
    %272 = vmatpush1.bf16.msra.mxu0 0
    %273 = vmatprep.mubr.bf16.mxu0 0
    %274 = vmatmul.mubr.bf16.gmra.mrb[0].mxu0 %v197
    %v275 = vpop.f32.mrb[0].mxu0
    %v276 = vadd.f32 %v236, %v275
    %v277 = vpop.f32.mrb[0].mxu0
    %v278 = vpop.f32.mrb[0].mxu0
    %v279 = vpop.f32.mrb[0].mxu0
    %280 = vdwg.mxu0
    %v281 = vmul.f32 %v276, 0.032258064
    %v282 = vrsqrt.pop %v281
    %v283 = vmul.f32 %v281, %v282
    %vm284 = vcmp.eq.f32.partialorder %v281, inf
    %v285 = vsel %vm284, %v281, %v283
    %vm286 = vcmp.eq.f32.partialorder %v281, 0.0
    %v287 = vand.u32 %v281, 2147483648
    %v288 = vsel %vm286, %v287, %v285
    %v289 = vadd.f32 %v288, 1e-06
    %v290 = vrcp.pop %v289
    %v291 = vmul.f32 %v289, %v290
    %v292 = vsub.f32 2.0, %v291
    %v293 = vmul.f32 %v290, %v292
    %v294 = vld [vmem:[%s2] sm:$0x1]
    %v296 = vlaneseq
    %v297 = vshrl.u32 %v296, 7
    %v298 = vsub.s32 0, %v297
    %v299 = vrot.slane %v294, %v298
    %v301 = vmul.f32 %v299, %v195
    %v302 = vmul.f32 %v301, %v293
    %v303 = vld [vmem:[%s3] sm:$0x1]
    %v305 = vlaneseq
    %v306 = vshrl.u32 %v305, 7
    %v307 = vsub.s32 0, %v306
    %v308 = vrot.slane %v303, %v307
    %v310 = vadd.f32 %v302, %v308
    %311 = vst [vmem:[#allocation7] sm:$0xff] %v310
    // Predicated region
    $region26: #{tpu_custom_call.1} parent=1 // pred_check
      _
    $region27: #{tpu_custom_call.1} parent=1 // pred_check_branch
      %313 = sbr.rel (0) target = $region29
    $region28: #{tpu_custom_call.1} parent=1 // pred_region
      %s315 = ssub.s32 128, 128
      %316 = vsyncadd [#allocation4], %s315
      %s318 = sshll.u32 [#allocation7], 4
      %s319 = int_to_ptr.vmem [resolvable:$true] %s318
      %321 = dma.vmem_to_hbm [thread:$0]  %s319, 128, %s4, [#allocation4]
    $region29: #{tpu_custom_call.1} parent=1 // pred_fallthru
      _
    // Predicated region
    $region30: #{tpu_custom_call.1} parent=1 // pred_check
      _
    $region31: #{tpu_custom_call.1} parent=1 // pred_check_branch
      %323 = sbr.rel (0) target = $region33
    $region32: #{tpu_custom_call.1} parent=1 // pred_region
      %324 = dma.done [#allocation4], 128
    $region33: #{tpu_custom_call.1} parent=1 // pred_fallthru
      _
    %325 = vsyncpa [#allocation3], 1
    %326 = vsyncpa [#allocation6], 1
    %327 = vsyncpa [#allocation4], 1

</llo_original>
